<compile_context>
chip_gen: v5e
topology: v5e:2x2
jax: 0.10.0
libtpu: 0.0.40
codegen_flags: <defaults>
</compile_context>

<pallas_src>
import functools

import jax
import jax.numpy as jnp
import numpy as np
from jax.experimental import pallas as pl
from jax.experimental.pallas import tpu as pltpu


def gru_chunk_kernel(blk_max_ref,          # SMEM (num_b_blocks,) int32  [scalar prefetch]
                     pre_ref,              # VMEM (T_CHUNK, 3, Bt, H) f32 pre-gates [r|z|n]
                     lens_ref,             # VMEM (Bt, 1) int32
                     whh_ref,              # VMEM (3, H, H) f32  (per-gate W_hh^T)
                     bhn_ref,              # VMEM (1, H) f32     (b_hn)
                     h_ref,                # out  (Bt, H) f32    (hidden state, resident over time)
                     *, t_chunk):
    bi = pl.program_id(0)
    tc = pl.program_id(1)

    @pl.when(tc == 0)
    def _init():
        h_ref[...] = jnp.zeros_like(h_ref)

    chunk_start = tc * t_chunk

    # Skip whole chunks once every sequence in this batch block has finished.
    @pl.when(chunk_start < blk_max_ref[bi])
    def _compute():
        lens = lens_ref[...]                     # (Bt, 1) int32
        w_r = whh_ref[0]                         # (H, H) lane-aligned, leading-index view
        w_z = whh_ref[1]
        w_n = whh_ref[2]
        b_hn = bhn_ref[...]                      # (1, H)

        def step(i, h):
            # Recurrent matmuls only — input projection was hoisted out.
            gh_r = jnp.dot(h, w_r, preferred_element_type=jnp.float32)
            gh_z = jnp.dot(h, w_z, preferred_element_type=jnp.float32)
            gh_n = jnp.dot(h, w_n, preferred_element_type=jnp.float32) + b_hn
            r = jax.nn.sigmoid(pre_ref[i, 0] + gh_r)
            z = jax.nn.sigmoid(pre_ref[i, 1] + gh_z)
            n = jnp.tanh(pre_ref[i, 2] + r * gh_n)
            h_new = n + z * (h - n)              # == (1 - z) * n + z * h
            # pack_padded_sequence: freeze hidden where t >= lengths[b].
            valid = (chunk_start + i) < lens     # (Bt, 1) bool
            return jnp.where(valid, h_new, h)

        h_ref[...] = jax.lax.fori_loop(0, t_chunk, step, h_ref[...], unroll=True)


def rnn_forward(x, lengths, params, *, t_chunk=8, b_tile=None):
    """x: (T, B) int32 tokens. lengths: (B,) int32. Returns (B,) float32."""
    T, B = x.shape
    emb_table = params["emb"]                     # (V, E)
    H = params["w_hh"].shape[1]                   # w_hh: (3H, H)

    b_tile = b_tile or B                          # set a multiple-of-8 tile to split batch on v7x
    assert B % b_tile == 0
    nb = B // b_tile

    t_chunk = min(t_chunk, max(T, 1))
    T_pad = -(-T // t_chunk) * t_chunk
    nt = T_pad // t_chunk

    # ---- Hoisted input projection: one big GEMM over all timesteps. --------
    # TODO(synk): for large vocab/seq, gather embedding rows inside the kernel
    # (scalar-prefetched ids + manual DMA) instead of materializing (T*B, E).
    embs = jnp.take(emb_table, x.reshape(-1), axis=0).astype(jnp.float32)      # (T*B, E)
    gi = embs @ params["w_ih"].T.astype(jnp.float32) + params["b_ih"]          # (T*B, 3H)
    gi = gi.reshape(T, B, 3, H)
    # Fold b_hr, b_hz into the r/z pre-gates (b_hn stays inside r*(...)).
    b_h = params["b_hh"].reshape(3, H).astype(jnp.float32)
    bias_fold = b_h.at[2].set(0.0)                                             # [b_hr, b_hz, 0]
    gi = gi + bias_fold[None, None, :, :]
    pre = jnp.transpose(gi, (0, 2, 1, 3))                                      # (T, 3, B, H)
    if T_pad != T:
        pre = jnp.pad(pre, ((0, T_pad - T), (0, 0), (0, 0), (0, 0)))

    # Per-gate W_hh^T, lane-aligned: (3, H_in, H_out).
    whh_g = params["w_hh"].reshape(3, H, H).transpose(0, 2, 1).astype(jnp.float32)
    b_hn = params["b_hh"][2 * H:].reshape(1, H).astype(jnp.float32)

    lens_i32 = lengths.astype(jnp.int32).reshape(B, 1)
    blk_max = lengths.astype(jnp.int32).reshape(nb, b_tile).max(axis=1)        # (nb,)

    kernel = functools.partial(gru_chunk_kernel, t_chunk=t_chunk)

    h_final = pl.pallas_call(
        kernel,
        out_shape=jax.ShapeDtypeStruct((B, H), jnp.float32),
        grid_spec=pltpu.PrefetchScalarGridSpec(
            num_scalar_prefetch=1,
            grid=(nb, nt),
            in_specs=[
                pl.BlockSpec((t_chunk, 3, b_tile, H), lambda bi, tc, bm: (tc, 0, bi, 0)),
                pl.BlockSpec((b_tile, 1), lambda bi, tc, bm: (bi, 0)),
                pl.BlockSpec((3, H, H), lambda bi, tc, bm: (0, 0, 0)),
                pl.BlockSpec((1, H), lambda bi, tc, bm: (0, 0)),
            ],
            out_specs=pl.BlockSpec((b_tile, H), lambda bi, tc, bm: (bi, 0)),
        ),
        compiler_params=pltpu.CompilerParams(
            dimension_semantics=("parallel", "arbitrary")),
    )(blk_max, pre, lens_i32, whh_g, b_hn)

    # Final Linear moved to the wrapper: one-off (B,H)@(H,1).
    out = h_final @ params["w_fc"].T.astype(jnp.float32) + params["b_fc"]
    return out[:, 0]


def rnn_reference(x, lengths, params):
    """Pure-JAX reference of the PyTorch forward (for validation)."""
    T, B = x.shape
    H = params["w_hh"].shape[1]
    embs = jnp.take(params["emb"], x, axis=0).astype(jnp.float32)

    def step(h, inp):
        x_t, t = inp
        gi = x_t @ params["w_ih"].T + params["b_ih"]
        gh = h @ params["w_hh"].T + params["b_hh"]
        i_r, i_z, i_n = jnp.split(gi, 3, axis=-1)
        h_r, h_z, h_n = jnp.split(gh, 3, axis=-1)
        r = jax.nn.sigmoid(i_r + h_r)
        z = jax.nn.sigmoid(i_z + h_z)
        n = jnp.tanh(i_n + r * h_n)
        h_new = (1.0 - z) * n + z * h
        m = (t < lengths)[:, None].astype(jnp.float32)
        h = m * h_new + (1.0 - m) * h
        return h, None

    h0 = jnp.zeros((B, H), jnp.float32)
    h_final, _ = jax.lax.scan(step, h0, (embs, jnp.arange(T)))
    return (h_final @ params["w_fc"].T + params["b_fc"])[:, 0]


def make_params(key, vocab_size, embedding_dim, hidden_dim):
    ks = jax.random.split(key, 7)
    bound = 1.0 / np.sqrt(hidden_dim)
    u = lambda k, shape: jax.random.uniform(k, shape, jnp.float32, -bound, bound)
    return {
        "emb": jax.random.normal(ks[0], (vocab_size, embedding_dim), jnp.float32),
        "w_ih": u(ks[1], (3 * hidden_dim, embedding_dim)),
        "w_hh": u(ks[2], (3 * hidden_dim, hidden_dim)),
        "b_ih": u(ks[3], (3 * hidden_dim,)),
        "b_hh": u(ks[4], (3 * hidden_dim,)),
        "w_fc": u(ks[5], (1, hidden_dim)),
        "b_fc": u(ks[6], (1,)),
    }


if __name__ == "__main__":
    T, B = 8, 4           # seq_len, batch
    V, E, H = 50, 32, 32  # vocab, embedding_dim, hidden_dim

    key = jax.random.PRNGKey(0)
    kp, kx = jax.random.split(key)
    params = make_params(kp, V, E, H)

    x = jax.random.randint(kx, (T, B), 0, V, dtype=jnp.int32)
    lengths = jnp.array([8, 6, 5, 3], dtype=jnp.int32)  # descending, as pack_padded_sequence expects

    # t_chunk=4 -> two time chunks per batch block, exercising the resident
    # hidden-state accumulator and the chunk-skip guard.
    out = rnn_forward(x, lengths, params, t_chunk=4)
    out = jax.block_until_ready(out)

    ref = jax.block_until_ready(rnn_reference(x, lengths, params))
    np.testing.assert_allclose(np.asarray(out), np.asarray(ref), rtol=1e-4, atol=1e-4)

    assert out.shape == (B,)
    print("KERNEL_OK")
</pallas_src>

<mosaic_0001>
module attributes {stable_mosaic.version = 11 : i64} {
  func.func @gru_chunk_kernel(%arg0: i32, %arg1: i32, %arg2: memref<1xi32, #tpu.memory_space<smem>>, %arg3: memref<4x3x4x32xf32, #tpu.memory_space<vmem>>, %arg4: memref<4x1xi32, #tpu.memory_space<vmem>>, %arg5: memref<3x32x32xf32, #tpu.memory_space<vmem>>, %arg6: memref<1x32xf32, #tpu.memory_space<vmem>>, %arg7: memref<4x32xf32, #tpu.memory_space<vmem>>) attributes {dimension_semantics = [#tpu.dimension_semantics<parallel>, #tpu.dimension_semantics<arbitrary>], iteration_bounds = array<i64: 1, 2>, scalar_prefetch = 1 : i64, scratch_operands = 0 : i64, tpu.core_type = #tpu.core_type<tc>, window_params = [{transform_indices = @transform_0, window_bounds = array<i64: 4, 3, 4, 32>}, {transform_indices = @transform_1, window_bounds = array<i64: 4, 1>}, {pipeline_mode = #tpu.pipeline_mode<synchronous>, transform_indices = @transform_2, window_bounds = array<i64: 3, 32, 32>}, {pipeline_mode = #tpu.pipeline_mode<synchronous>, transform_indices = @transform_3, window_bounds = array<i64: 1, 32>}, {transform_indices = @transform_4, window_bounds = array<i64: 4, 32>}]} {
    %c0_i32 = arith.constant 0 : i32
    %0 = arith.cmpi eq, %arg1, %c0_i32 : i32
    %1 = arith.extui %0 : i1 to i32
    %c0_i32_0 = arith.constant 0 : i32
    %2 = arith.cmpi ne, %1, %c0_i32_0 : i32
    scf.if %2 {
      %cst = arith.constant 0.000000e+00 : f32
      %9 = vector.broadcast %cst : f32 to vector<4x32xf32>
      %c0 = arith.constant 0 : index
      %c0_2 = arith.constant 0 : index
      %10 = vector.load %arg7[%c0, %c0_2] : memref<4x32xf32, #tpu.memory_space<vmem>>, vector<4x32xf32>
      tpu.vector_store %arg7[%c0, %c0_2], %9 {strides = array<i32>} : memref<4x32xf32, #tpu.memory_space<vmem>>, vector<4x32xf32>,
    } else {
    }
    %c4_i32 = arith.constant 4 : i32
    %3 = arith.muli %arg1, %c4_i32 : i32
    %4 = arith.index_cast %arg0 : i32 to index
    %5 = memref.load %arg2[%4] : memref<1xi32, #tpu.memory_space<smem>>
    %6 = arith.cmpi slt, %3, %5 : i32
    %7 = arith.extui %6 : i1 to i32
    %c0_i32_1 = arith.constant 0 : i32
    %8 = arith.cmpi ne, %7, %c0_i32_1 : i32
    scf.if %8 {
      %c0 = arith.constant 0 : index
      %c0_2 = arith.constant 0 : index
      %9 = vector.load %arg4[%c0, %c0_2] : memref<4x1xi32, #tpu.memory_space<vmem>>, vector<4x1xi32>
      %c0_3 = arith.constant 0 : index
      %c0_4 = arith.constant 0 : index
      %c0_5 = arith.constant 0 : index
      %10 = vector.load %arg5[%c0_3, %c0_4, %c0_5] : memref<3x32x32xf32, #tpu.memory_space<vmem>>, vector<1x32x32xf32>
      %11 = vector.shape_cast %10 : vector<1x32x32xf32> to vector<32x32xf32>
      %c1 = arith.constant 1 : index
      %c0_6 = arith.constant 0 : index
      %c0_7 = arith.constant 0 : index
      %12 = vector.load %arg5[%c1, %c0_6, %c0_7] : memref<3x32x32xf32, #tpu.memory_space<vmem>>, vector<1x32x32xf32>
      %13 = vector.shape_cast %12 : vector<1x32x32xf32> to vector<32x32xf32>
      %c2 = arith.constant 2 : index
      %c0_8 = arith.constant 0 : index
      %c0_9 = arith.constant 0 : index
      %14 = vector.load %arg5[%c2, %c0_8, %c0_9] : memref<3x32x32xf32, #tpu.memory_space<vmem>>, vector<1x32x32xf32>
      %15 = vector.shape_cast %14 : vector<1x32x32xf32> to vector<32x32xf32>
      %c0_10 = arith.constant 0 : index
      %c0_11 = arith.constant 0 : index
      %16 = vector.load %arg6[%c0_10, %c0_11] : memref<1x32xf32, #tpu.memory_space<vmem>>, vector<1x32xf32>
      %c0_12 = arith.constant 0 : index
      %c0_13 = arith.constant 0 : index
      %17 = vector.load %arg7[%c0_12, %c0_13] : memref<4x32xf32, #tpu.memory_space<vmem>>, vector<4x32xf32>
      %c0_i32_14 = arith.constant 0 : i32
      %cst = arith.constant dense<0.000000e+00> : vector<4x32xf32>
      %18 = tpu.matmul %17, %11, %cst {dimension_numbers = #tpu.dot_dimension_numbers<[1], [0], [0], [1], [0, 0, 1, 1], [], []>} : vector<4x32xf32>, vector<32x32xf32>, vector<4x32xf32> -> vector<4x32xf32>
      %cst_15 = arith.constant dense<0.000000e+00> : vector<4x32xf32>
      %19 = tpu.matmul %17, %13, %cst_15 {dimension_numbers = #tpu.dot_dimension_numbers<[1], [0], [0], [1], [0, 0, 1, 1], [], []>} : vector<4x32xf32>, vector<32x32xf32>, vector<4x32xf32> -> vector<4x32xf32>
      %cst_16 = arith.constant dense<0.000000e+00> : vector<4x32xf32>
      %20 = tpu.matmul %17, %15, %cst_16 {dimension_numbers = #tpu.dot_dimension_numbers<[1], [0], [0], [1], [0, 0, 1, 1], [], []>} : vector<4x32xf32>, vector<32x32xf32>, vector<4x32xf32> -> vector<4x32xf32>
      %21 = vector.broadcast %16 : vector<1x32xf32> to vector<4x32xf32>
      %22 = arith.addf %20, %21 : vector<4x32xf32>
      %23 = arith.index_cast %c0_i32_14 : i32 to index
      %c0_17 = arith.constant 0 : index
      %c0_18 = arith.constant 0 : index
      %c0_19 = arith.constant 0 : index
      %24 = vector.load %arg3[%23, %c0_17, %c0_18, %c0_19] : memref<4x3x4x32xf32, #tpu.memory_space<vmem>>, vector<1x1x4x32xf32>
      %25 = vector.shape_cast %24 : vector<1x1x4x32xf32> to vector<4x32xf32>
      %26 = arith.addf %25, %18 : vector<4x32xf32>
      %27 = arith.negf %26 : vector<4x32xf32>
      %28 = math.exp %27 : vector<4x32xf32>
      %cst_20 = arith.constant 1.000000e+00 : f32
      %29 = vector.broadcast %cst_20 : f32 to vector<4x32xf32>
      %30 = arith.addf %29, %28 : vector<4x32xf32>
      %31 = arith.divf %29, %30 : vector<4x32xf32>
      %32 = arith.index_cast %c0_i32_14 : i32 to index
      %c1_21 = arith.constant 1 : index
      %c0_22 = arith.constant 0 : index
      %c0_23 = arith.constant 0 : index
      %33 = vector.load %arg3[%32, %c1_21, %c0_22, %c0_23] : memref<4x3x4x32xf32, #tpu.memory_space<vmem>>, vector<1x1x4x32xf32>
      %34 = vector.shape_cast %33 : vector<1x1x4x32xf32> to vector<4x32xf32>
      %35 = arith.addf %34, %19 : vector<4x32xf32>
      %36 = arith.negf %35 : vector<4x32xf32>
      %37 = math.exp %36 : vector<4x32xf32>
      %cst_24 = arith.constant 1.000000e+00 : f32
      %38 = vector.broadcast %cst_24 : f32 to vector<4x32xf32>
      %39 = arith.addf %38, %37 : vector<4x32xf32>
      %40 = arith.divf %38, %39 : vector<4x32xf32>
      %41 = arith.index_cast %c0_i32_14 : i32 to index
      %c2_25 = arith.constant 2 : index
      %c0_26 = arith.constant 0 : index
      %c0_27 = arith.constant 0 : index
      %42 = vector.load %arg3[%41, %c2_25, %c0_26, %c0_27] : memref<4x3x4x32xf32, #tpu.memory_space<vmem>>, vector<1x1x4x32xf32>
      %43 = vector.shape_cast %42 : vector<1x1x4x32xf32> to vector<4x32xf32>
      %44 = arith.mulf %31, %22 : vector<4x32xf32>
      %45 = arith.addf %43, %44 : vector<4x32xf32>
      %46 = math.tanh %45 : vector<4x32xf32>
      %47 = arith.subf %17, %46 : vector<4x32xf32>
      %48 = arith.mulf %40, %47 : vector<4x32xf32>
      %49 = arith.addf %46, %48 : vector<4x32xf32>
      %50 = arith.addi %3, %c0_i32_14 : i32
      %51 = vector.broadcast %50 : i32 to vector<4x1xi32>
      %52 = arith.cmpi slt, %51, %9 : vector<4x1xi32>
      %53 = vector.shape_cast %52 : vector<4x1xi1> to vector<4x1xi1>
      %54 = vector.broadcast %53 : vector<4x1xi1> to vector<4x32xi1>
      %55 = arith.select %54, %49, %17 : vector<4x32xi1>, vector<4x32xf32>
      %c1_i32 = arith.constant 1 : i32
      %cst_28 = arith.constant dense<0.000000e+00> : vector<4x32xf32>
      %56 = tpu.matmul %55, %11, %cst_28 {dimension_numbers = #tpu.dot_dimension_numbers<[1], [0], [0], [1], [0, 0, 1, 1], [], []>} : vector<4x32xf32>, vector<32x32xf32>, vector<4x32xf32> -> vector<4x32xf32>
      %cst_29 = arith.constant dense<0.000000e+00> : vector<4x32xf32>
      %57 = tpu.matmul %55, %13, %cst_29 {dimension_numbers = #tpu.dot_dimension_numbers<[1], [0], [0], [1], [0, 0, 1, 1], [], []>} : vector<4x32xf32>, vector<32x32xf32>, vector<4x32xf32> -> vector<4x32xf32>
      %cst_30 = arith.constant dense<0.000000e+00> : vector<4x32xf32>
      %58 = tpu.matmul %55, %15, %cst_30 {dimension_numbers = #tpu.dot_dimension_numbers<[1], [0], [0], [1], [0, 0, 1, 1], [], []>} : vector<4x32xf32>, vector<32x32xf32>, vector<4x32xf32> -> vector<4x32xf32>
      %59 = vector.broadcast %16 : vector<1x32xf32> to vector<4x32xf32>
      %60 = arith.addf %58, %59 : vector<4x32xf32>
      %61 = arith.index_cast %c1_i32 : i32 to index
      %c0_31 = arith.constant 0 : index
      %c0_32 = arith.constant 0 : index
      %c0_33 = arith.constant 0 : index
      %62 = vector.load %arg3[%61, %c0_31, %c0_32, %c0_33] : memref<4x3x4x32xf32, #tpu.memory_space<vmem>>, vector<1x1x4x32xf32>
      %63 = vector.shape_cast %62 : vector<1x1x4x32xf32> to vector<4x32xf32>
      %64 = arith.addf %63, %56 : vector<4x32xf32>
      %65 = arith.negf %64 : vector<4x32xf32>
      %66 = math.exp %65 : vector<4x32xf32>
      %cst_34 = arith.constant 1.000000e+00 : f32
      %67 = vector.broadcast %cst_34 : f32 to vector<4x32xf32>
      %68 = arith.addf %67, %66 : vector<4x32xf32>
      %69 = arith.divf %67, %68 : vector<4x32xf32>
      %70 = arith.index_cast %c1_i32 : i32 to index
      %c1_35 = arith.constant 1 : index
      %c0_36 = arith.constant 0 : index
      %c0_37 = arith.constant 0 : index
      %71 = vector.load %arg3[%70, %c1_35, %c0_36, %c0_37] : memref<4x3x4x32xf32, #tpu.memory_space<vmem>>, vector<1x1x4x32xf32>
      %72 = vector.shape_cast %71 : vector<1x1x4x32xf32> to vector<4x32xf32>
      %73 = arith.addf %72, %57 : vector<4x32xf32>
      %74 = arith.negf %73 : vector<4x32xf32>
      %75 = math.exp %74 : vector<4x32xf32>
      %cst_38 = arith.constant 1.000000e+00 : f32
      %76 = vector.broadcast %cst_38 : f32 to vector<4x32xf32>
      %77 = arith.addf %76, %75 : vector<4x32xf32>
      %78 = arith.divf %76, %77 : vector<4x32xf32>
      %79 = arith.index_cast %c1_i32 : i32 to index
      %c2_39 = arith.constant 2 : index
      %c0_40 = arith.constant 0 : index
      %c0_41 = arith.constant 0 : index
      %80 = vector.load %arg3[%79, %c2_39, %c0_40, %c0_41] : memref<4x3x4x32xf32, #tpu.memory_space<vmem>>, vector<1x1x4x32xf32>
      %81 = vector.shape_cast %80 : vector<1x1x4x32xf32> to vector<4x32xf32>
      %82 = arith.mulf %69, %60 : vector<4x32xf32>
      %83 = arith.addf %81, %82 : vector<4x32xf32>
      %84 = math.tanh %83 : vector<4x32xf32>
      %85 = arith.subf %55, %84 : vector<4x32xf32>
      %86 = arith.mulf %78, %85 : vector<4x32xf32>
      %87 = arith.addf %84, %86 : vector<4x32xf32>
      %88 = arith.addi %3, %c1_i32 : i32
      %89 = vector.broadcast %88 : i32 to vector<4x1xi32>
      %90 = arith.cmpi slt, %89, %9 : vector<4x1xi32>
      %91 = vector.shape_cast %90 : vector<4x1xi1> to vector<4x1xi1>
      %92 = vector.broadcast %91 : vector<4x1xi1> to vector<4x32xi1>
      %93 = arith.select %92, %87, %55 : vector<4x32xi1>, vector<4x32xf32>
      %c2_i32 = arith.constant 2 : i32
      %cst_42 = arith.constant dense<0.000000e+00> : vector<4x32xf32>
      %94 = tpu.matmul %93, %11, %cst_42 {dimension_numbers = #tpu.dot_dimension_numbers<[1], [0], [0], [1], [0, 0, 1, 1], [], []>} : vector<4x32xf32>, vector<32x32xf32>, vector<4x32xf32> -> vector<4x32xf32>
      %cst_43 = arith.constant dense<0.000000e+00> : vector<4x32xf32>
      %95 = tpu.matmul %93, %13, %cst_43 {dimension_numbers = #tpu.dot_dimension_numbers<[1], [0], [0], [1], [0, 0, 1, 1], [], []>} : vector<4x32xf32>, vector<32x32xf32>, vector<4x32xf32> -> vector<4x32xf32>
      %cst_44 = arith.constant dense<0.000000e+00> : vector<4x32xf32>
      %96 = tpu.matmul %93, %15, %cst_44 {dimension_numbers = #tpu.dot_dimension_numbers<[1], [0], [0], [1], [0, 0, 1, 1], [], []>} : vector<4x32xf32>, vector<32x32xf32>, vector<4x32xf32> -> vector<4x32xf32>
      %97 = vector.broadcast %16 : vector<1x32xf32> to vector<4x32xf32>
      %98 = arith.addf %96, %97 : vector<4x32xf32>
      %99 = arith.index_cast %c2_i32 : i32 to index
      %c0_45 = arith.constant 0 : index
      %c0_46 = arith.constant 0 : index
      %c0_47 = arith.constant 0 : index
      %100 = vector.load %arg3[%99, %c0_45, %c0_46, %c0_47] : memref<4x3x4x32xf32, #tpu.memory_space<vmem>>, vector<1x1x4x32xf32>
      %101 = vector.shape_cast %100 : vector<1x1x4x32xf32> to vector<4x32xf32>
      %102 = arith.addf %101, %94 : vector<4x32xf32>
      %103 = arith.negf %102 : vector<4x32xf32>
      %104 = math.exp %103 : vector<4x32xf32>
      %cst_48 = arith.constant 1.000000e+00 : f32
      %105 = vector.broadcast %cst_48 : f32 to vector<4x32xf32>
      %106 = arith.addf %105, %104 : vector<4x32xf32>
      %107 = arith.divf %105, %106 : vector<4x32xf32>
      %108 = arith.index_cast %c2_i32 : i32 to index
      %c1_49 = arith.constant 1 : index
      %c0_50 = arith.constant 0 : index
      %c0_51 = arith.constant 0 : index
      %109 = vector.load %arg3[%108, %c1_49, %c0_50, %c0_51] : memref<4x3x4x32xf32, #tpu.memory_space<vmem>>, vector<1x1x4x32xf32>
      %110 = vector.shape_cast %109 : vector<1x1x4x32xf32> to vector<4x32xf32>
      %111 = arith.addf %110, %95 : vector<4x32xf32>
      %112 = arith.negf %111 : vector<4x32xf32>
      %113 = math.exp %112 : vector<4x32xf32>
      %cst_52 = arith.constant 1.000000e+00 : f32
      %114 = vector.broadcast %cst_52 : f32 to vector<4x32xf32>
      %115 = arith.addf %114, %113 : vector<4x32xf32>
      %116 = arith.divf %114, %115 : vector<4x32xf32>
      %117 = arith.index_cast %c2_i32 : i32 to index
      %c2_53 = arith.constant 2 : index
      %c0_54 = arith.constant 0 : index
      %c0_55 = arith.constant 0 : index
      %118 = vector.load %arg3[%117, %c2_53, %c0_54, %c0_55] : memref<4x3x4x32xf32, #tpu.memory_space<vmem>>, vector<1x1x4x32xf32>
      %119 = vector.shape_cast %118 : vector<1x1x4x32xf32> to vector<4x32xf32>
      %120 = arith.mulf %107, %98 : vector<4x32xf32>
      %121 = arith.addf %119, %120 : vector<4x32xf32>
      %122 = math.tanh %121 : vector<4x32xf32>
      %123 = arith.subf %93, %122 : vector<4x32xf32>
      %124 = arith.mulf %116, %123 : vector<4x32xf32>
      %125 = arith.addf %122, %124 : vector<4x32xf32>
      %126 = arith.addi %3, %c2_i32 : i32
      %127 = vector.broadcast %126 : i32 to vector<4x1xi32>
      %128 = arith.cmpi slt, %127, %9 : vector<4x1xi32>
      %129 = vector.shape_cast %128 : vector<4x1xi1> to vector<4x1xi1>
      %130 = vector.broadcast %129 : vector<4x1xi1> to vector<4x32xi1>
      %131 = arith.select %130, %125, %93 : vector<4x32xi1>, vector<4x32xf32>
      %c3_i32 = arith.constant 3 : i32
      %cst_56 = arith.constant dense<0.000000e+00> : vector<4x32xf32>
      %132 = tpu.matmul %131, %11, %cst_56 {dimension_numbers = #tpu.dot_dimension_numbers<[1], [0], [0], [1], [0, 0, 1, 1], [], []>} : vector<4x32xf32>, vector<32x32xf32>, vector<4x32xf32> -> vector<4x32xf32>
      %cst_57 = arith.constant dense<0.000000e+00> : vector<4x32xf32>
      %133 = tpu.matmul %131, %13, %cst_57 {dimension_numbers = #tpu.dot_dimension_numbers<[1], [0], [0], [1], [0, 0, 1, 1], [], []>} : vector<4x32xf32>, vector<32x32xf32>, vector<4x32xf32> -> vector<4x32xf32>
      %cst_58 = arith.constant dense<0.000000e+00> : vector<4x32xf32>
      %134 = tpu.matmul %131, %15, %cst_58 {dimension_numbers = #tpu.dot_dimension_numbers<[1], [0], [0], [1], [0, 0, 1, 1], [], []>} : vector<4x32xf32>, vector<32x32xf32>, vector<4x32xf32> -> vector<4x32xf32>
      %135 = vector.broadcast %16 : vector<1x32xf32> to vector<4x32xf32>
      %136 = arith.addf %134, %135 : vector<4x32xf32>
      %137 = arith.index_cast %c3_i32 : i32 to index
      %c0_59 = arith.constant 0 : index
      %c0_60 = arith.constant 0 : index
      %c0_61 = arith.constant 0 : index
      %138 = vector.load %arg3[%137, %c0_59, %c0_60, %c0_61] : memref<4x3x4x32xf32, #tpu.memory_space<vmem>>, vector<1x1x4x32xf32>
      %139 = vector.shape_cast %138 : vector<1x1x4x32xf32> to vector<4x32xf32>
      %140 = arith.addf %139, %132 : vector<4x32xf32>
      %141 = arith.negf %140 : vector<4x32xf32>
      %142 = math.exp %141 : vector<4x32xf32>
      %cst_62 = arith.constant 1.000000e+00 : f32
      %143 = vector.broadcast %cst_62 : f32 to vector<4x32xf32>
      %144 = arith.addf %143, %142 : vector<4x32xf32>
      %145 = arith.divf %143, %144 : vector<4x32xf32>
      %146 = arith.index_cast %c3_i32 : i32 to index
      %c1_63 = arith.constant 1 : index
      %c0_64 = arith.constant 0 : index
      %c0_65 = arith.constant 0 : index
      %147 = vector.load %arg3[%146, %c1_63, %c0_64, %c0_65] : memref<4x3x4x32xf32, #tpu.memory_space<vmem>>, vector<1x1x4x32xf32>
      %148 = vector.shape_cast %147 : vector<1x1x4x32xf32> to vector<4x32xf32>
      %149 = arith.addf %148, %133 : vector<4x32xf32>
      %150 = arith.negf %149 : vector<4x32xf32>
      %151 = math.exp %150 : vector<4x32xf32>
      %cst_66 = arith.constant 1.000000e+00 : f32
      %152 = vector.broadcast %cst_66 : f32 to vector<4x32xf32>
      %153 = arith.addf %152, %151 : vector<4x32xf32>
      %154 = arith.divf %152, %153 : vector<4x32xf32>
      %155 = arith.index_cast %c3_i32 : i32 to index
      %c2_67 = arith.constant 2 : index
      %c0_68 = arith.constant 0 : index
      %c0_69 = arith.constant 0 : index
      %156 = vector.load %arg3[%155, %c2_67, %c0_68, %c0_69] : memref<4x3x4x32xf32, #tpu.memory_space<vmem>>, vector<1x1x4x32xf32>
      %157 = vector.shape_cast %156 : vector<1x1x4x32xf32> to vector<4x32xf32>
      %158 = arith.mulf %145, %136 : vector<4x32xf32>
      %159 = arith.addf %157, %158 : vector<4x32xf32>
      %160 = math.tanh %159 : vector<4x32xf32>
      %161 = arith.subf %131, %160 : vector<4x32xf32>
      %162 = arith.mulf %154, %161 : vector<4x32xf32>
      %163 = arith.addf %160, %162 : vector<4x32xf32>
      %164 = arith.addi %3, %c3_i32 : i32
      %165 = vector.broadcast %164 : i32 to vector<4x1xi32>
      %166 = arith.cmpi slt, %165, %9 : vector<4x1xi32>
      %167 = vector.shape_cast %166 : vector<4x1xi1> to vector<4x1xi1>
      %168 = vector.broadcast %167 : vector<4x1xi1> to vector<4x32xi1>
      %169 = arith.select %168, %163, %131 : vector<4x32xi1>, vector<4x32xf32>
      %c4_i32_70 = arith.constant 4 : i32
      %c0_71 = arith.constant 0 : index
      %c0_72 = arith.constant 0 : index
      %170 = vector.load %arg7[%c0_71, %c0_72] : memref<4x32xf32, #tpu.memory_space<vmem>>, vector<4x32xf32>
      tpu.vector_store %arg7[%c0_71, %c0_72], %169 {strides = array<i32>} : memref<4x32xf32, #tpu.memory_space<vmem>>, vector<4x32xf32>,
    } else {
    }
    return
  }
  func.func @transform_0(%arg0: i32, %arg1: i32, %arg2: memref<1xi32, #tpu.memory_space<smem>>) -> (i32, i32, i32, i32) {
    %c0_i32 = arith.constant 0 : i32
    %c0_i32_0 = arith.constant 0 : i32
    %c0_i32_1 = arith.constant 0 : i32
    return %arg1, %c0_i32, %arg0, %c0_i32_0 : i32, i32, i32, i32
  }
  func.func @transform_1(%arg0: i32, %arg1: i32, %arg2: memref<1xi32, #tpu.memory_space<smem>>) -> (i32, i32) {
    %c0_i32 = arith.constant 0 : i32
    %c0_i32_0 = arith.constant 0 : i32
    return %arg0, %c0_i32 : i32, i32
  }
  func.func @transform_2(%arg0: i32, %arg1: i32, %arg2: memref<1xi32, #tpu.memory_space<smem>>) -> (i32, i32, i32) {
    %c0_i32 = arith.constant 0 : i32
    %c0_i32_0 = arith.constant 0 : i32
    %c0_i32_1 = arith.constant 0 : i32
    %c0_i32_2 = arith.constant 0 : i32
    return %c0_i32, %c0_i32_0, %c0_i32_1 : i32, i32, i32
  }
  func.func @transform_3(%arg0: i32, %arg1: i32, %arg2: memref<1xi32, #tpu.memory_space<smem>>) -> (i32, i32) {
    %c0_i32 = arith.constant 0 : i32
    %c0_i32_0 = arith.constant 0 : i32
    %c0_i32_1 = arith.constant 0 : i32
    return %c0_i32, %c0_i32_0 : i32, i32
  }
  func.func @transform_4(%arg0: i32, %arg1: i32, %arg2: memref<1xi32, #tpu.memory_space<smem>>) -> (i32, i32) {
    %c0_i32 = arith.constant 0 : i32
    %c0_i32_0 = arith.constant 0 : i32
    return %arg0, %c0_i32 : i32, i32
  }
}

</mosaic_0001>

<llo_original>
// kernel: tpu_custom_call.1
$region0: #{tpu_custom_call.1}
  #allocation0 [shape = 'u32[]', space=smem, size = 0x4, offset = 0x4, fixed_abs, tag = 'smem constant byte address 0x4 - core index']
  #allocation1 [shape = 'u32[72,128]{1,0:T(1,128)}', space=vmem, size = 0x9000, scoped, tag = 'internal scratch']
  #allocation2 [shape = 's32[1]{0}', space=sflag, size = 0x4, scoped, tag = 'scoped memory for tpu_custom_call.1']
  #allocation3 [shape = 's32[1]{0:T(128)S(6)}', space=smem, size = 0x200, scoped, tag = 'prefetched SMEM operand 0']
  %s0 = inlined_call_operand.<no memory space> [shape: s32[1], index: 0, kind: input, shape index: {}]
  %s1 = inlined_call_operand.hbm [shape: f32[8,3,4,32], index: 1, kind: input, shape index: {}]
  %s2 = inlined_call_operand.vmem [shape: s32[4,1], index: 2, kind: input, shape index: {}]
  %s3 = inlined_call_operand.hbm [shape: f32[3,32,32], index: 3, kind: input, shape index: {}]
  %s4 = inlined_call_operand.vmem [shape: f32[1,32], index: 4, kind: input, shape index: {}]
  %s5 = inlined_call_operand.hbm [shape: f32[4,32], index: 5, kind: output, shape index: {}]
  %s6 = sld [smem:[#allocation0]]
  $region65: #{tpu_custom_call.1} parent=0
    _
  %s8 = ssub.s32 1, %s6
  %s9 = scalar_select 0, %s8, %s6
  %10 = sst [smem:[#allocation3]] %s0
  $region1: #{tpu_custom_call.1} parent=0
    #allocation4 [shape = 'u8[49152]{0}', space=vmem, size = 0xc000, scoped, tag = 'input window, operand 1']
    #allocation5 [shape = 's32[2]{0}', space=sflag, size = 0x8, scoped, tag = 'scoped memory for tpu_custom_call.1']
    #allocation6 [shape = 's32[2]{0}', space=sflag, size = 0x8, scoped, tag = 'scoped memory for tpu_custom_call.1']
    #allocation7 [shape = 'u8[49152]{0}', space=vmem, size = 0xc000, scoped, tag = 'input window, operand 3, single buffered']
    #allocation8 [shape = 's32[1]{0}', space=sflag, size = 0x4, scoped, tag = 'scoped memory for tpu_custom_call.1']
    #allocation9 [shape = 'u8[2048]{0}', space=vmem, size = 0x800, scoped, tag = 'output window, operand 0, single buffered']
    %11 = vsyncpa [#allocation5], 0
    %s12 = scalar_lea.sflag [#allocation5], 1
    %13 = vsyncpa %s12, 0
    %14 = vsyncpa [#allocation8], 0
    %15 = vsyncpa [#allocation6], 0
    loop: start=0, step=1, limit=4
    $region2: #{tpu_custom_call.1} parent=1 // loop_pre_header
      _
    $region3: #{tpu_custom_call.1} parent=1 // loop_header
      %s17 = sphi 0, %s21
      %p18 = scmp.ge.s32.totalorder %s17, 4
      %s24 = sphi 0, %s36
      %s25 = sphi 0, %s32
      %s26 = sphi 0, %s24
      %s27 = sphi 0, %s25
      %s28 = sphi 0, %s26
      %s29 = sphi 0, %s27
      %s41 = sphi 0, %s43
      %s44 = sphi 0, %s41
      %s45 = sphi 0, %s44
      %s61 = sphi 0, %s45
      %s67 = sphi 0, %s69
      %s70 = sphi 0, %s67
      %s71 = sphi 0, %s70
      %s87 = sphi 0, %s71
      %s91 = sphi 0, %s91
      %s93 = sphi 0, %s91
      %s94 = sphi 0, %s93
      %s108 = sphi 0, %s94
      %s112 = sphi 0, %s112
      %s114 = sphi 0, %s112
      %s115 = sphi 0, %s114
      %s129 = sphi 0, %s115
      %s135 = sphi 0, %s137
      %s138 = sphi 0, %s135
      %s139 = sphi 0, %s138
      %s155 = sphi 0, %s139
    $region4: #{tpu_custom_call.1} parent=1 // loop_header_branch
      %20 = sbr.rel (%p18) target = $region8
    $region5: #{tpu_custom_call.1} parent=1 // loop_body
      %s22 = ssub.s32 %s17, 1
      %s23 = ssub.s32 %s17, 2
      %s30 = sadd.s32 1, %s25
      %p31 = scmp.ge.s32.totalorder %s30, 2
      %s32 = scalar_select %p31, 0, %s30
      %s33 = sadd.s32 1, %s24
      %s34 = scalar_select %p31, %s33, %s24
      %p35 = scmp.ge.s32.totalorder %s34, 1
      %s36 = scalar_select %p35, 0, %s34
      %s37 = ssub.s32 %s25, %s32
      %s38 = ssub.s32 %s24, %s36
      %s39 = sor.u32 %s37, %s38
      %p40 = scmp.eq.s32.totalorder %s39, 0
      %s42 = sadd.s32 %s41, 1
      %s43 = scalar_select %p40, %s41, %s42
      %p46 = pneg %p40
      %p47 = scmp.eq.s32.totalorder %s17, 1
      %p48 = por %p46, %p47
      %p49 = scmp.ne.s32.totalorder %s41, %s44
      %p50 = scmp.eq.s32.totalorder %s17, 0
      %p51 = por %p49, %p50
      %p52 = scmp.ne.s32.totalorder %s41, %s44
      %p53 = scmp.eq.s32.totalorder %s22, 1
      %p54 = por %p52, %p53
      %p55 = scmp.ne.s32.totalorder %s44, %s45
      %p56 = scmp.eq.s32.totalorder %s22, 0
      %p57 = por %p55, %p56
      %p58 = scmp.ne.s32.totalorder %s44, %s45
      %p59 = scmp.eq.s32.totalorder %s23, 1
      %p60 = por %p58, %p59
      %p62 = scmp.ne.s32.totalorder %s45, %s61
      %p63 = scmp.eq.s32.totalorder %s23, 0
      %p64 = por %p62, %p63
      %s65 = ssub.s32 %s24, %s36
      %p66 = scmp.eq.s32.totalorder %s65, 0
      %s68 = sadd.s32 %s67, 1
      %s69 = scalar_select %p66, %s67, %s68
      %p72 = pneg %p66
      %p73 = scmp.eq.s32.totalorder %s17, 1
      %p74 = por %p72, %p73
      %p75 = scmp.ne.s32.totalorder %s67, %s70
      %p76 = scmp.eq.s32.totalorder %s17, 0
      %p77 = por %p75, %p76
      %p78 = scmp.ne.s32.totalorder %s67, %s70
      %p79 = scmp.eq.s32.totalorder %s22, 1
      %p80 = por %p78, %p79
      %p81 = scmp.ne.s32.totalorder %s70, %s71
      %p82 = scmp.eq.s32.totalorder %s22, 0
      %p83 = por %p81, %p82
      %p84 = scmp.ne.s32.totalorder %s70, %s71
      %p85 = scmp.eq.s32.totalorder %s23, 1
      %p86 = por %p84, %p85
      %p88 = scmp.ne.s32.totalorder %s71, %s87
      %p89 = scmp.eq.s32.totalorder %s23, 0
      %p90 = por %p88, %p89
      %s92 = sadd.s32 %s91, 1
      %p95 = scmp.eq.s32.totalorder %s17, 1
      %p96 = scmp.ne.s32.totalorder %s91, %s93
      %p97 = scmp.eq.s32.totalorder %s17, 0
      %p98 = por %p96, %p97
      %p99 = scmp.ne.s32.totalorder %s91, %s93
      %p100 = scmp.eq.s32.totalorder %s22, 1
      %p101 = por %p99, %p100
      %p102 = scmp.ne.s32.totalorder %s93, %s94
      %p103 = scmp.eq.s32.totalorder %s22, 0
      %p104 = por %p102, %p103
      %p105 = scmp.ne.s32.totalorder %s93, %s94
      %p106 = scmp.eq.s32.totalorder %s23, 1
      %p107 = por %p105, %p106
      %p109 = scmp.ne.s32.totalorder %s94, %s108
      %p110 = scmp.eq.s32.totalorder %s23, 0
      %p111 = por %p109, %p110
      %s113 = sadd.s32 %s112, 1
      %p116 = scmp.eq.s32.totalorder %s17, 1
      %p117 = scmp.ne.s32.totalorder %s112, %s114
      %p118 = scmp.eq.s32.totalorder %s17, 0
      %p119 = por %p117, %p118
      %p120 = scmp.ne.s32.totalorder %s112, %s114
      %p121 = scmp.eq.s32.totalorder %s22, 1
      %p122 = por %p120, %p121
      %p123 = scmp.ne.s32.totalorder %s114, %s115
      %p124 = scmp.eq.s32.totalorder %s22, 0
      %p125 = por %p123, %p124
      %p126 = scmp.ne.s32.totalorder %s114, %s115
      %p127 = scmp.eq.s32.totalorder %s23, 1
      %p128 = por %p126, %p127
      %p130 = scmp.ne.s32.totalorder %s115, %s129
      %p131 = scmp.eq.s32.totalorder %s23, 0
      %p132 = por %p130, %p131
      %s133 = ssub.s32 %s24, %s36
      %p134 = scmp.eq.s32.totalorder %s133, 0
      %s136 = sadd.s32 %s135, 1
      %s137 = scalar_select %p134, %s135, %s136
      %p140 = pneg %p134
      %p141 = scmp.eq.s32.totalorder %s17, 1
      %p142 = por %p140, %p141
      %p143 = scmp.ne.s32.totalorder %s135, %s138
      %p144 = scmp.eq.s32.totalorder %s17, 0
      %p145 = por %p143, %p144
      %p146 = scmp.ne.s32.totalorder %s135, %s138
      %p147 = scmp.eq.s32.totalorder %s22, 1
      %p148 = por %p146, %p147
      %p149 = scmp.ne.s32.totalorder %s138, %s139
      %p150 = scmp.eq.s32.totalorder %s22, 0
      %p151 = por %p149, %p150
      %p152 = scmp.ne.s32.totalorder %s138, %s139
      %p153 = scmp.eq.s32.totalorder %s23, 1
      %p154 = por %p152, %p153
      %p156 = scmp.ne.s32.totalorder %s139, %s155
      %p157 = scmp.eq.s32.totalorder %s23, 0
      %p158 = por %p156, %p157
      %p159 = scmp.le.s32.totalorder 1, %s17
      %p160 = scmp.lt.s32.totalorder %s17, 3
      %p161 = pnand %p159, %p160
      %p162 = pneg %p161
      // Predicated region
      $region9: #{tpu_custom_call.1} parent=5 // pred_check
        _
      $region10: #{tpu_custom_call.1} parent=5 // pred_check_branch
        %164 = sbr.rel (%p161) target = $region12
      $region11: #{tpu_custom_call.1} parent=5 // pred_region
        %s165 = ssub.s32 %s17, 1
        // Predicated region
        $region13: #{tpu_custom_call.1} parent=11 // pred_check
          %p166 = pneg %p83
        $region14: #{tpu_custom_call.1} parent=11 // pred_check_branch
          %168 = sbr.rel (%p166) target = $region16
        $region15: #{tpu_custom_call.1} parent=11 // pred_region
          %p169 = scmp.lt.s32.totalorder %s26, 0
          %s170 = scalar_select %p169, %s26, 0
          %s171 = smul.addr %s170, 4
          %s172 = scalar_lea.vmem %s2, %s171
        $region16: #{tpu_custom_call.1} parent=11 // pred_fallthru
          _
        // Predicated region
        $region17: #{tpu_custom_call.1} parent=11 // pred_check
          %p173 = pneg %p104
        $region18: #{tpu_custom_call.1} parent=11 // pred_check_branch
          %175 = sbr.rel (%p173) target = $region20
        $region19: #{tpu_custom_call.1} parent=11 // pred_region
          %177 = vsyncadd [#allocation8], 0
          %s178 = sshll.u32 %s3, 4
          %s179 = int_to_ptr.hbm [resolvable:$true] %s178
          %s180 = sshll.u32 [#allocation7], 4
          %s181 = int_to_ptr.vmem [resolvable:$true] %s180
          %186 = dma.hbm_to_vmem [thread:$0]  %s179, 1536, %s181, [#allocation8], 128, 128, 8
        $region20: #{tpu_custom_call.1} parent=11 // pred_fallthru
          _
        // Predicated region
        $region21: #{tpu_custom_call.1} parent=11 // pred_check
          %p187 = pneg %p125
        $region22: #{tpu_custom_call.1} parent=11 // pred_check_branch
          %189 = sbr.rel (%p187) target = $region24
        $region23: #{tpu_custom_call.1} parent=11 // pred_region
          _
        $region24: #{tpu_custom_call.1} parent=11 // pred_fallthru
          _
      $region12: #{tpu_custom_call.1} parent=5 // pred_fallthru
        _
      %p190 = scmp.lt.s32.totalorder %s17, 2
      // Predicated region
      $region25: #{tpu_custom_call.1} parent=5 // pred_check
        %p191 = pneg %p190
      $region26: #{tpu_custom_call.1} parent=5 // pred_check_branch
        %193 = sbr.rel (%p191) target = $region28
      $region27: #{tpu_custom_call.1} parent=5 // pred_region
        // Predicated region
        $region29: #{tpu_custom_call.1} parent=27 // pred_check
          %p194 = pneg %p51
        $region30: #{tpu_custom_call.1} parent=27 // pred_check_branch
          %196 = sbr.rel (%p194) target = $region32
        $region31: #{tpu_custom_call.1} parent=27 // pred_region
          %s197 = sand.u32 %s41, 1
          %s198 = scalar_lea.sflag [#allocation5], %s197
          %s199 = sand.u32 %s41, 1
          %s200 = smul.addr %s199, 48
          %s201 = scalar_lea.vmem [#allocation4], %s200
          %s202 = smul.u32 4, %s25
          %204 = vsyncadd %s198, 0
          %s205 = smul.addr %s202, 3
          %s206 = sadd.s32 %s24, %s205
          %s207 = smul.addr %s206, 4
          %s208 = scalar_lea.hbm %s1, %s207
          %s209 = sshll.u32 %s208, 4
          %s210 = int_to_ptr.hbm [resolvable:$true] %s209
          %s211 = sshll.u32 %s201, 4
          %s212 = int_to_ptr.vmem [resolvable:$true] %s211
          %217 = dma.hbm_to_vmem [thread:$0]  %s210, 768, %s212, %s198, 64, 64, 4
        $region32: #{tpu_custom_call.1} parent=27 // pred_fallthru
          _
      $region28: #{tpu_custom_call.1} parent=5 // pred_fallthru
        _
      %p218 = scmp.le.s32.totalorder 1, %s17
      %p219 = scmp.lt.s32.totalorder %s17, 3
      %p220 = pnand %p218, %p219
      %p221 = pneg %p220
      // Predicated region
      $region33: #{tpu_custom_call.1} parent=5 // pred_check
        _
      $region34: #{tpu_custom_call.1} parent=5 // pred_check_branch
        %223 = sbr.rel (%p220) target = $region36
      $region35: #{tpu_custom_call.1} parent=5 // pred_region
        %s224 = ssub.s32 %s17, 1
        %s225 = sand.u32 %s44, 1
        %s226 = scalar_lea.sflag [#allocation5], %s225
        %s227 = sand.u32 %s44, 1
        %s228 = smul.addr %s227, 48
        %s229 = scalar_lea.vmem [#allocation4], %s228
        // Predicated region
        $region37: #{tpu_custom_call.1} parent=35 // pred_check
          %p230 = pneg %p57
        $region38: #{tpu_custom_call.1} parent=35 // pred_check_branch
          %232 = sbr.rel (%p230) target = $region40
        $region39: #{tpu_custom_call.1} parent=35 // pred_region
          %234 = dma.done %s226, 768
        $region40: #{tpu_custom_call.1} parent=35 // pred_fallthru
          _
        // Predicated region
        $region41: #{tpu_custom_call.1} parent=35 // pred_check
          %p235 = pneg %p104
        $region42: #{tpu_custom_call.1} parent=35 // pred_check_branch
          %237 = sbr.rel (%p235) target = $region44
        $region43: #{tpu_custom_call.1} parent=35 // pred_region
          %239 = dma.done [#allocation8], 1536
        $region44: #{tpu_custom_call.1} parent=35 // pred_fallthru
          _
        %s240 = sand.u32 %s44, 1
        %s241 = scalar_lea.sflag [#allocation5], %s240
        %s242 = sand.u32 %s44, 1
        %s243 = smul.addr %s242, 48
        %s244 = scalar_lea.vmem [#allocation4], %s243
        %p245 = pneg %p57
        %p246 = pneg %p54
        %p247 = scmp.lt.s32.totalorder %s26, 0
        %s248 = scalar_select %p247, %s26, 0
        %s249 = smul.addr %s248, 4
        %s250 = scalar_lea.vmem %s2, %s249
        %p251 = pneg %p83
        %p252 = pneg %p80
        %p253 = pneg %p104
        %p254 = pneg %p101
        %p255 = pneg %p125
        %p256 = pneg %p122
        %p257 = pneg %p151
        %p258 = pneg %p148
        %s259 = smul.u32 4, %s27
        %p260 = scmp.lt.s32.totalorder %s26, 0
        %s261 = scalar_select %p260, %s26, 0
        %s262 = smul.addr %s261, 4
        %s263 = scalar_lea.vmem %s2, %s262
        %p264 = scmp.eq.s32.totalorder %s27, 0
        // Predicated region
        $region45: #{tpu_custom_call.1} parent=35 // pred_check
          %p265 = pneg %p264
        $region46: #{tpu_custom_call.1} parent=35 // pred_check_branch
          %267 = sbr.rel (%p265) target = $region48
        $region47: #{tpu_custom_call.1} parent=35 // pred_region
          %vm268 = vcmask 257024
          %269 = vst.msk [vmem:[#allocation9] sm:$0xf] %vm268, 0.0
        $region48: #{tpu_custom_call.1} parent=35 // pred_fallthru
          _
        %s270 = smul.u32 %s27, 4
        %s271 = sld [smem:[#allocation3 + %s26]]
        %p272 = scmp.lt.s32.totalorder %s270, %s271
        // Predicated region
        $region49: #{tpu_custom_call.1} parent=35 // pred_check
          %p273 = pneg %p272
        $region50: #{tpu_custom_call.1} parent=35 // pred_check_branch
          %275 = sbr.rel (%p273) target = $region52
        $region51: #{tpu_custom_call.1} parent=35 // pred_region
          %v276 = vld [vmem:[%s263] sm:$0xf]
          %v277 = vld [vmem:[#allocation7] sm:$0xff]
          %v278 = vld [vmem:[#allocation7 + $0x8] sm:$0xff]
          %v279 = vld [vmem:[#allocation7 + $0x10] sm:$0xff]
          %v280 = vld [vmem:[#allocation7 + $0x18] sm:$0xff]
          %s281 = scalar_lea.vmem [#allocation7], 32
          %v282 = vld [vmem:[%s281] sm:$0xff]
          %v283 = vld [vmem:[%s281 + $0x8] sm:$0xff]
          %v284 = vld [vmem:[%s281 + $0x10] sm:$0xff]
          %v285 = vld [vmem:[%s281 + $0x18] sm:$0xff]
          %s286 = scalar_lea.vmem [#allocation7], 64
          %v287 = vld [vmem:[%s286] sm:$0xff]
          %v288 = vld [vmem:[%s286 + $0x8] sm:$0xff]
          %v289 = vld [vmem:[%s286 + $0x10] sm:$0xff]
          %v290 = vld [vmem:[%s286 + $0x18] sm:$0xff]
          %v291 = vld [vmem:[%s4] sm:$0x1]
          %v292 = vld [vmem:[#allocation9] sm:$0xf]
          %vm293 = vcmask 261120
          %v295 = vsel %vm293, %v292, 0
          %297 = vmatpush.msra.mxu0 0.0
          %298 = vmatpush.msra.mxu0 0.0
          %299 = vmatpush.msra.mxu0 0.0
          %300 = vmatpush.msra.mxu0 0.0
          %301 = vmatpush.msra.mxu0 0.0
          %302 = vmatpush.msra.mxu0 0.0
          %303 = vmatpush.msra.mxu0 0.0
          %304 = vmatpush.msra.mxu0 0.0
          %305 = vmatpush.msra.mxu0 0.0
          %306 = vmatpush.msra.mxu0 0.0
          %307 = vmatpush.msra.mxu0 0.0
          %308 = vmatpush.msra.mxu0 0.0
          %309 = vmatpush.msra.mxu0 %v280
          %310 = vmatpush.msra.mxu0 %v279
          %311 = vmatpush.msra.mxu0 %v278
          %312 = vmatpush.msra.mxu0 %v277
          %313 = vmatmul.f32.gmra.mxu0 %v295
          %v314 = vpop.f32.mrf.mxu0
          %v315 = vadd.f32 0.0, %v314
          %316 = vdwg.mxu0
          %317 = vmatpush.msra.mxu0 0.0
          %318 = vmatpush.msra.mxu0 0.0
          %319 = vmatpush.msra.mxu0 0.0
          %320 = vmatpush.msra.mxu0 0.0
          %321 = vmatpush.msra.mxu0 0.0
          %322 = vmatpush.msra.mxu0 0.0
          %323 = vmatpush.msra.mxu0 0.0
          %324 = vmatpush.msra.mxu0 0.0
          %325 = vmatpush.msra.mxu0 0.0
          %326 = vmatpush.msra.mxu0 0.0
          %327 = vmatpush.msra.mxu0 0.0
          %328 = vmatpush.msra.mxu0 0.0
          %329 = vmatpush.msra.mxu0 %v285
          %330 = vmatpush.msra.mxu0 %v284
          %331 = vmatpush.msra.mxu0 %v283
          %332 = vmatpush.msra.mxu0 %v282
          %333 = vmatmul.f32.gmra.mxu0 %v295
          %v334 = vpop.f32.mrf.mxu0
          %v335 = vadd.f32 0.0, %v334
          %336 = vdwg.mxu0
          %v338 = vperm.slane %v291, 0
          %340 = vmatpush.msra.mxu0 0.0
          %341 = vmatpush.msra.mxu0 0.0
          %342 = vmatpush.msra.mxu0 0.0
          %343 = vmatpush.msra.mxu0 0.0
          %344 = vmatpush.msra.mxu0 0.0
          %345 = vmatpush.msra.mxu0 0.0
          %346 = vmatpush.msra.mxu0 0.0
          %347 = vmatpush.msra.mxu0 0.0
          %348 = vmatpush.msra.mxu0 0.0
          %349 = vmatpush.msra.mxu0 0.0
          %350 = vmatpush.msra.mxu0 0.0
          %351 = vmatpush.msra.mxu0 0.0
          %352 = vmatpush.msra.mxu0 %v290
          %353 = vmatpush.msra.mxu0 %v289
          %354 = vmatpush.msra.mxu0 %v288
          %355 = vmatpush.msra.mxu0 %v287
          %356 = vmatmul.f32.gmra.mxu0 %v295
          %v357 = vpop.f32.mrf.mxu0
          %v358 = vadd.f32 %v338, %v357
          %359 = vdwg.mxu0
          %v360 = vld [vmem:[%s229] sm:$0xf]
          %v361 = vadd.f32 %v360, %v315
          %v362 = vxor.u32 %v361, 2147483648
          %v363 = vmul.f32 %v362, 1.442695
          %v364 = vpow.pop %v363
          %v365 = vadd.f32 %v364, 1.0
          %v366 = vrcp.pop %v365
          %v367 = vmul.f32 %v365, %v366
          %v368 = vsub.f32 1.0, %v367
          %v369 = vmul.f32 %v366, %v368
          %v370 = vadd.f32 %v366, %v369
          %vm371 = vweird.f32 %v365
          %vm372 = vweird.f32 %v366
          %vm373 = vmor %vm371, %vm372
          %v374 = vsel %vm373, %v366, %v370
          %v375 = vand.u32 2147483647, %v365
          %vm376 = vcmp.eq.f32.partialorder %v375, 8.507059e+37
          %v377 = vand.u32 %v365, 2147483648
          %v378 = vor.u32 1.1754944e-38, %v377
          %v379 = vsel %vm376, %v378, %v374
          %v380 = vmul.f32 1.0, %v379
          %s381 = scalar_lea.vmem %s229, 4 [#allocation4]
          %v382 = vld [vmem:[%s381] sm:$0xf]
          %v383 = vadd.f32 %v382, %v335
          %v384 = vxor.u32 %v383, 2147483648
          %v385 = vmul.f32 %v384, 1.442695
          %v386 = vpow.pop %v385
          %v387 = vadd.f32 %v386, 1.0
          %v388 = vrcp.pop %v387
          %v389 = vmul.f32 %v387, %v388
          %v390 = vsub.f32 1.0, %v389
          %v391 = vmul.f32 %v388, %v390
          %v392 = vadd.f32 %v388, %v391
          %vm393 = vweird.f32 %v387
          %vm394 = vweird.f32 %v388
          %vm395 = vmor %vm393, %vm394
          %v396 = vsel %vm395, %v388, %v392
          %v397 = vand.u32 2147483647, %v387
          %vm398 = vcmp.eq.f32.partialorder %v397, 8.507059e+37
          %v399 = vand.u32 %v387, 2147483648
          %v400 = vor.u32 1.1754944e-38, %v399
          %v401 = vsel %vm398, %v400, %v396
          %v402 = vmul.f32 1.0, %v401
          %s403 = scalar_lea.vmem %s229, 8 [#allocation4]
          %v404 = vld [vmem:[%s403] sm:$0xf]
          %v405 = vmul.f32 %v380, %v358
          %v406 = vadd.f32 %v404, %v405
          %v407 = vtanh.pop %v406
          %v408 = vsub.f32 %v292, %v407
          %v409 = vmul.f32 %v402, %v408
          %v410 = vadd.f32 %v407, %v409
          %v411 = vstv %s270
          %vm412 = vcmp.lt.s32.totalorder %v411, %v276
          %v413 = vsel %vm412, 1, 0
          %414 = vset.pattern.permute.xlu0 0
          %415 = vperm.xlu0 %414, %v413
          %v416 = vpop.permute.xlu0 %415
          %vm417 = vcmp.eq.s32.totalorder %v416, 1
          %v418 = vsel %vm417, %v410, %v292
          %v420 = vsel %vm293, %v418, 0
          %422 = vmatpush.msra.mxu0 0.0
          %423 = vmatpush.msra.mxu0 0.0
          %424 = vmatpush.msra.mxu0 0.0
          %425 = vmatpush.msra.mxu0 0.0
          %426 = vmatpush.msra.mxu0 0.0
          %427 = vmatpush.msra.mxu0 0.0
          %428 = vmatpush.msra.mxu0 0.0
          %429 = vmatpush.msra.mxu0 0.0
          %430 = vmatpush.msra.mxu0 0.0
          %431 = vmatpush.msra.mxu0 0.0
          %432 = vmatpush.msra.mxu0 0.0
          %433 = vmatpush.msra.mxu0 0.0
          %434 = vmatpush.msra.mxu0 %v280
          %435 = vmatpush.msra.mxu0 %v279
          %436 = vmatpush.msra.mxu0 %v278
          %437 = vmatpush.msra.mxu0 %v277
          %438 = vmatmul.f32.gmra.mxu0 %v420
          %v439 = vpop.f32.mrf.mxu0
          %v440 = vadd.f32 0.0, %v439
          %441 = vdwg.mxu0
          %442 = vmatpush.msra.mxu0 0.0
          %443 = vmatpush.msra.mxu0 0.0
          %444 = vmatpush.msra.mxu0 0.0
          %445 = vmatpush.msra.mxu0 0.0
          %446 = vmatpush.msra.mxu0 0.0
          %447 = vmatpush.msra.mxu0 0.0
          %448 = vmatpush.msra.mxu0 0.0
          %449 = vmatpush.msra.mxu0 0.0
          %450 = vmatpush.msra.mxu0 0.0
          %451 = vmatpush.msra.mxu0 0.0
          %452 = vmatpush.msra.mxu0 0.0
          %453 = vmatpush.msra.mxu0 0.0
          %454 = vmatpush.msra.mxu0 %v285
          %455 = vmatpush.msra.mxu0 %v284
          %456 = vmatpush.msra.mxu0 %v283
          %457 = vmatpush.msra.mxu0 %v282
          %458 = vmatmul.f32.gmra.mxu0 %v420
          %v459 = vpop.f32.mrf.mxu0
          %v460 = vadd.f32 0.0, %v459
          %461 = vdwg.mxu0
          %462 = vmatpush.msra.mxu0 0.0
          %463 = vmatpush.msra.mxu0 0.0
          %464 = vmatpush.msra.mxu0 0.0
          %465 = vmatpush.msra.mxu0 0.0
          %466 = vmatpush.msra.mxu0 0.0
          %467 = vmatpush.msra.mxu0 0.0
          %468 = vmatpush.msra.mxu0 0.0
          %469 = vmatpush.msra.mxu0 0.0
          %470 = vmatpush.msra.mxu0 0.0
          %471 = vmatpush.msra.mxu0 0.0
          %472 = vmatpush.msra.mxu0 0.0
          %473 = vmatpush.msra.mxu0 0.0
          %474 = vmatpush.msra.mxu0 %v290
          %475 = vmatpush.msra.mxu0 %v289
          %476 = vmatpush.msra.mxu0 %v288
          %477 = vmatpush.msra.mxu0 %v287
          %478 = vmatmul.f32.gmra.mxu0 %v420
          %v479 = vpop.f32.mrf.mxu0
          %v480 = vadd.f32 %v338, %v479
          %481 = vdwg.mxu0
          %s482 = scalar_lea.vmem %s229, 12 [#allocation4]
          %v483 = vld [vmem:[%s482] sm:$0xf]
          %v484 = vadd.f32 %v483, %v440
          %v485 = vxor.u32 %v484, 2147483648
          %v486 = vmul.f32 %v485, 1.442695
          %v487 = vpow.pop %v486
          %v488 = vadd.f32 %v487, 1.0
          %v489 = vrcp.pop %v488
          %v490 = vmul.f32 %v488, %v489
          %v491 = vsub.f32 1.0, %v490
          %v492 = vmul.f32 %v489, %v491
          %v493 = vadd.f32 %v489, %v492
          %vm494 = vweird.f32 %v488
          %vm495 = vweird.f32 %v489
          %vm496 = vmor %vm494, %vm495
          %v497 = vsel %vm496, %v489, %v493
          %v498 = vand.u32 2147483647, %v488
          %vm499 = vcmp.eq.f32.partialorder %v498, 8.507059e+37
          %v500 = vand.u32 %v488, 2147483648
          %v501 = vor.u32 1.1754944e-38, %v500
          %v502 = vsel %vm499, %v501, %v497
          %v503 = vmul.f32 1.0, %v502
          %s504 = scalar_lea.vmem %s229, 16 [#allocation4]
          %v505 = vld [vmem:[%s504] sm:$0xf]
          %v506 = vadd.f32 %v505, %v460
          %v507 = vxor.u32 %v506, 2147483648
          %v508 = vmul.f32 %v507, 1.442695
          %v509 = vpow.pop %v508
          %v510 = vadd.f32 %v509, 1.0
          %v511 = vrcp.pop %v510
          %v512 = vmul.f32 %v510, %v511
          %v513 = vsub.f32 1.0, %v512
          %v514 = vmul.f32 %v511, %v513
          %v515 = vadd.f32 %v511, %v514
          %vm516 = vweird.f32 %v510
          %vm517 = vweird.f32 %v511
          %vm518 = vmor %vm516, %vm517
          %v519 = vsel %vm518, %v511, %v515
          %v520 = vand.u32 2147483647, %v510
          %vm521 = vcmp.eq.f32.partialorder %v520, 8.507059e+37
          %v522 = vand.u32 %v510, 2147483648
          %v523 = vor.u32 1.1754944e-38, %v522
          %v524 = vsel %vm521, %v523, %v519
          %v525 = vmul.f32 1.0, %v524
          %s526 = scalar_lea.vmem %s229, 20 [#allocation4]
          %v527 = vld [vmem:[%s526] sm:$0xf]
          %v528 = vmul.f32 %v503, %v480
          %v529 = vadd.f32 %v527, %v528
          %v530 = vtanh.pop %v529
          %v531 = vsub.f32 %v418, %v530
          %v532 = vmul.f32 %v525, %v531
          %v533 = vadd.f32 %v530, %v532
          %s534 = sadd.s32 %s270, 1
          %v535 = vstv %s534
          %vm536 = vcmp.lt.s32.totalorder %v535, %v276
          %v537 = vsel %vm536, 1, 0
          %538 = vset.pattern.permute.xlu0 0
          %539 = vperm.xlu0 %538, %v537
          %v540 = vpop.permute.xlu0 %539
          %vm541 = vcmp.eq.s32.totalorder %v540, 1
          %v542 = vsel %vm541, %v533, %v418
          %v544 = vsel %vm293, %v542, 0
          %546 = vmatpush.msra.mxu0 0.0
          %547 = vmatpush.msra.mxu0 0.0
          %548 = vmatpush.msra.mxu0 0.0
          %549 = vmatpush.msra.mxu0 0.0
          %550 = vmatpush.msra.mxu0 0.0
          %551 = vmatpush.msra.mxu0 0.0
          %552 = vmatpush.msra.mxu0 0.0
          %553 = vmatpush.msra.mxu0 0.0
          %554 = vmatpush.msra.mxu0 0.0
          %555 = vmatpush.msra.mxu0 0.0
          %556 = vmatpush.msra.mxu0 0.0
          %557 = vmatpush.msra.mxu0 0.0
          %558 = vmatpush.msra.mxu0 %v280
          %559 = vmatpush.msra.mxu0 %v279
          %560 = vmatpush.msra.mxu0 %v278
          %561 = vmatpush.msra.mxu0 %v277
          %562 = vmatmul.f32.gmra.mxu0 %v544
          %v563 = vpop.f32.mrf.mxu0
          %v564 = vadd.f32 0.0, %v563
          %565 = vdwg.mxu0
          %566 = vmatpush.msra.mxu0 0.0
          %567 = vmatpush.msra.mxu0 0.0
          %568 = vmatpush.msra.mxu0 0.0
          %569 = vmatpush.msra.mxu0 0.0
          %570 = vmatpush.msra.mxu0 0.0
          %571 = vmatpush.msra.mxu0 0.0
          %572 = vmatpush.msra.mxu0 0.0
          %573 = vmatpush.msra.mxu0 0.0
          %574 = vmatpush.msra.mxu0 0.0
          %575 = vmatpush.msra.mxu0 0.0
          %576 = vmatpush.msra.mxu0 0.0
          %577 = vmatpush.msra.mxu0 0.0
          %578 = vmatpush.msra.mxu0 %v285
          %579 = vmatpush.msra.mxu0 %v284
          %580 = vmatpush.msra.mxu0 %v283
          %581 = vmatpush.msra.mxu0 %v282
          %582 = vmatmul.f32.gmra.mxu0 %v544
          %v583 = vpop.f32.mrf.mxu0
          %v584 = vadd.f32 0.0, %v583
          %585 = vdwg.mxu0
          %586 = vmatpush.msra.mxu0 0.0
          %587 = vmatpush.msra.mxu0 0.0
          %588 = vmatpush.msra.mxu0 0.0
          %589 = vmatpush.msra.mxu0 0.0
          %590 = vmatpush.msra.mxu0 0.0
          %591 = vmatpush.msra.mxu0 0.0
          %592 = vmatpush.msra.mxu0 0.0
          %593 = vmatpush.msra.mxu0 0.0
          %594 = vmatpush.msra.mxu0 0.0
          %595 = vmatpush.msra.mxu0 0.0
          %596 = vmatpush.msra.mxu0 0.0
          %597 = vmatpush.msra.mxu0 0.0
          %598 = vmatpush.msra.mxu0 %v290
          %599 = vmatpush.msra.mxu0 %v289
          %600 = vmatpush.msra.mxu0 %v288
          %601 = vmatpush.msra.mxu0 %v287
          %602 = vmatmul.f32.gmra.mxu0 %v544
          %v603 = vpop.f32.mrf.mxu0
          %v604 = vadd.f32 %v338, %v603
          %605 = vdwg.mxu0
          %s606 = scalar_lea.vmem %s229, 24 [#allocation4]
          %v607 = vld [vmem:[%s606] sm:$0xf]
          %v608 = vadd.f32 %v607, %v564
          %v609 = vxor.u32 %v608, 2147483648
          %v610 = vmul.f32 %v609, 1.442695
          %v611 = vpow.pop %v610
          %v612 = vadd.f32 %v611, 1.0
          %v613 = vrcp.pop %v612
          %v614 = vmul.f32 %v612, %v613
          %v615 = vsub.f32 1.0, %v614
          %v616 = vmul.f32 %v613, %v615
          %v617 = vadd.f32 %v613, %v616
          %vm618 = vweird.f32 %v612
          %vm619 = vweird.f32 %v613
          %vm620 = vmor %vm618, %vm619
          %v621 = vsel %vm620, %v613, %v617
          %v622 = vand.u32 2147483647, %v612
          %vm623 = vcmp.eq.f32.partialorder %v622, 8.507059e+37
          %v624 = vand.u32 %v612, 2147483648
          %v625 = vor.u32 1.1754944e-38, %v624
          %v626 = vsel %vm623, %v625, %v621
          %v627 = vmul.f32 1.0, %v626
          %s628 = scalar_lea.vmem %s229, 28 [#allocation4]
          %v629 = vld [vmem:[%s628] sm:$0xf]
          %v630 = vadd.f32 %v629, %v584
          %v631 = vxor.u32 %v630, 2147483648
          %v632 = vmul.f32 %v631, 1.442695
          %v633 = vpow.pop %v632
          %v634 = vadd.f32 %v633, 1.0
          %v635 = vrcp.pop %v634
          %v636 = vmul.f32 %v634, %v635
          %v637 = vsub.f32 1.0, %v636
          %v638 = vmul.f32 %v635, %v637
          %v639 = vadd.f32 %v635, %v638
          %vm640 = vweird.f32 %v634
          %vm641 = vweird.f32 %v635
          %vm642 = vmor %vm640, %vm641
          %v643 = vsel %vm642, %v635, %v639
          %v644 = vand.u32 2147483647, %v634
          %vm645 = vcmp.eq.f32.partialorder %v644, 8.507059e+37
          %v646 = vand.u32 %v634, 2147483648
          %v647 = vor.u32 1.1754944e-38, %v646
          %v648 = vsel %vm645, %v647, %v643
          %v649 = vmul.f32 1.0, %v648
          %s650 = scalar_lea.vmem %s229, 32 [#allocation4]
          %v651 = vld [vmem:[%s650] sm:$0xf]
          %v652 = vmul.f32 %v627, %v604
          %v653 = vadd.f32 %v651, %v652
          %v654 = vtanh.pop %v653
          %v655 = vsub.f32 %v542, %v654
          %v656 = vmul.f32 %v649, %v655
          %v657 = vadd.f32 %v654, %v656
          %s658 = sadd.s32 %s270, 2
          %v659 = vstv %s658
          %vm660 = vcmp.lt.s32.totalorder %v659, %v276
          %v661 = vsel %vm660, 1, 0
          %662 = vset.pattern.permute.xlu0 0
          %663 = vperm.xlu0 %662, %v661
          %v664 = vpop.permute.xlu0 %663
          %vm665 = vcmp.eq.s32.totalorder %v664, 1
          %v666 = vsel %vm665, %v657, %v542
          %v668 = vsel %vm293, %v666, 0
          %670 = vmatpush.msra.mxu0 0.0
          %671 = vmatpush.msra.mxu0 0.0
          %672 = vmatpush.msra.mxu0 0.0
          %673 = vmatpush.msra.mxu0 0.0
          %674 = vmatpush.msra.mxu0 0.0
          %675 = vmatpush.msra.mxu0 0.0
          %676 = vmatpush.msra.mxu0 0.0
          %677 = vmatpush.msra.mxu0 0.0
          %678 = vmatpush.msra.mxu0 0.0
          %679 = vmatpush.msra.mxu0 0.0
          %680 = vmatpush.msra.mxu0 0.0
          %681 = vmatpush.msra.mxu0 0.0
          %682 = vmatpush.msra.mxu0 %v280
          %683 = vmatpush.msra.mxu0 %v279
          %684 = vmatpush.msra.mxu0 %v278
          %685 = vmatpush.msra.mxu0 %v277
          %686 = vmatmul.f32.gmra.mxu0 %v668
          %v687 = vpop.f32.mrf.mxu0
          %v688 = vadd.f32 0.0, %v687
          %689 = vdwg.mxu0
          %690 = vmatpush.msra.mxu0 0.0
          %691 = vmatpush.msra.mxu0 0.0
          %692 = vmatpush.msra.mxu0 0.0
          %693 = vmatpush.msra.mxu0 0.0
          %694 = vmatpush.msra.mxu0 0.0
          %695 = vmatpush.msra.mxu0 0.0
          %696 = vmatpush.msra.mxu0 0.0
          %697 = vmatpush.msra.mxu0 0.0
          %698 = vmatpush.msra.mxu0 0.0
          %699 = vmatpush.msra.mxu0 0.0
          %700 = vmatpush.msra.mxu0 0.0
          %701 = vmatpush.msra.mxu0 0.0
          %702 = vmatpush.msra.mxu0 %v285
          %703 = vmatpush.msra.mxu0 %v284
          %704 = vmatpush.msra.mxu0 %v283
          %705 = vmatpush.msra.mxu0 %v282
          %706 = vmatmul.f32.gmra.mxu0 %v668
          %v707 = vpop.f32.mrf.mxu0
          %v708 = vadd.f32 0.0, %v707
          %709 = vdwg.mxu0
          %710 = vmatpush.msra.mxu0 0.0
          %711 = vmatpush.msra.mxu0 0.0
          %712 = vmatpush.msra.mxu0 0.0
          %713 = vmatpush.msra.mxu0 0.0
          %714 = vmatpush.msra.mxu0 0.0
          %715 = vmatpush.msra.mxu0 0.0
          %716 = vmatpush.msra.mxu0 0.0
          %717 = vmatpush.msra.mxu0 0.0
          %718 = vmatpush.msra.mxu0 0.0
          %719 = vmatpush.msra.mxu0 0.0
          %720 = vmatpush.msra.mxu0 0.0
          %721 = vmatpush.msra.mxu0 0.0
          %722 = vmatpush.msra.mxu0 %v290
          %723 = vmatpush.msra.mxu0 %v289
          %724 = vmatpush.msra.mxu0 %v288
          %725 = vmatpush.msra.mxu0 %v287
          %726 = vmatmul.f32.gmra.mxu0 %v668
          %v727 = vpop.f32.mrf.mxu0
          %v728 = vadd.f32 %v338, %v727
          %729 = vdwg.mxu0
          %s730 = scalar_lea.vmem %s229, 36 [#allocation4]
          %v731 = vld [vmem:[%s730] sm:$0xf]
          %v732 = vadd.f32 %v731, %v688
          %v733 = vxor.u32 %v732, 2147483648
          %v734 = vmul.f32 %v733, 1.442695
          %v735 = vpow.pop %v734
          %v736 = vadd.f32 %v735, 1.0
          %v737 = vrcp.pop %v736
          %v738 = vmul.f32 %v736, %v737
          %v739 = vsub.f32 1.0, %v738
          %v740 = vmul.f32 %v737, %v739
          %v741 = vadd.f32 %v737, %v740
          %vm742 = vweird.f32 %v736
          %vm743 = vweird.f32 %v737
          %vm744 = vmor %vm742, %vm743
          %v745 = vsel %vm744, %v737, %v741
          %v746 = vand.u32 2147483647, %v736
          %vm747 = vcmp.eq.f32.partialorder %v746, 8.507059e+37
          %v748 = vand.u32 %v736, 2147483648
          %v749 = vor.u32 1.1754944e-38, %v748
          %v750 = vsel %vm747, %v749, %v745
          %v751 = vmul.f32 1.0, %v750
          %s752 = scalar_lea.vmem %s229, 40 [#allocation4]
          %v753 = vld [vmem:[%s752] sm:$0xf]
          %v754 = vadd.f32 %v753, %v708
          %v755 = vxor.u32 %v754, 2147483648
          %v756 = vmul.f32 %v755, 1.442695
          %v757 = vpow.pop %v756
          %v758 = vadd.f32 %v757, 1.0
          %v759 = vrcp.pop %v758
          %v760 = vmul.f32 %v758, %v759
          %v761 = vsub.f32 1.0, %v760
          %v762 = vmul.f32 %v759, %v761
          %v763 = vadd.f32 %v759, %v762
          %vm764 = vweird.f32 %v758
          %vm765 = vweird.f32 %v759
          %vm766 = vmor %vm764, %vm765
          %v767 = vsel %vm766, %v759, %v763
          %v768 = vand.u32 2147483647, %v758
          %vm769 = vcmp.eq.f32.partialorder %v768, 8.507059e+37
          %v770 = vand.u32 %v758, 2147483648
          %v771 = vor.u32 1.1754944e-38, %v770
          %v772 = vsel %vm769, %v771, %v767
          %v773 = vmul.f32 1.0, %v772
          %s774 = scalar_lea.vmem %s229, 44 [#allocation4]
          %v775 = vld [vmem:[%s774] sm:$0xf]
          %v776 = vmul.f32 %v751, %v728
          %v777 = vadd.f32 %v775, %v776
          %v778 = vtanh.pop %v777
          %v779 = vsub.f32 %v666, %v778
          %v780 = vmul.f32 %v773, %v779
          %v781 = vadd.f32 %v778, %v780
          %s782 = sadd.s32 %s270, 3
          %v783 = vstv %s782
          %vm784 = vcmp.lt.s32.totalorder %v783, %v276
          %v785 = vsel %vm784, 1, 0
          %786 = vset.pattern.permute.xlu0 0
          %787 = vperm.xlu0 %786, %v785
          %v788 = vpop.permute.xlu0 %787
          %vm789 = vcmp.eq.s32.totalorder %v788, 1
          %v790 = vsel %vm789, %v781, %v666
          %vm791 = vcmask 257024
          %792 = vst.msk [vmem:[#allocation9] sm:$0xf] %vm791, %v790
        $region52: #{tpu_custom_call.1} parent=35 // pred_fallthru
          _
        // Predicated region
        $region53: #{tpu_custom_call.1} parent=35 // pred_check
          %p793 = pneg %p148
        $region54: #{tpu_custom_call.1} parent=35 // pred_check_branch
          %795 = sbr.rel (%p793) target = $region56
        $region55: #{tpu_custom_call.1} parent=35 // pred_region
          %797 = vsyncadd [#allocation6], 0
          %s798 = smul.addr %s26, 4
          %s799 = scalar_lea.hbm %s5, %s798
          %s801 = sshll.u32 [#allocation9], 4
          %s802 = int_to_ptr.vmem [resolvable:$true] %s801
          %s803 = sshll.u32 %s799, 4
          %s804 = int_to_ptr.hbm [resolvable:$true] %s803
          %806 = dma.vmem_to_hbm [thread:$0]  %s802, 64, %s804, [#allocation6]
        $region56: #{tpu_custom_call.1} parent=35 // pred_fallthru
          _
        // Predicated region
        $region57: #{tpu_custom_call.1} parent=35 // pred_check
          %p807 = pneg %p148
        $region58: #{tpu_custom_call.1} parent=35 // pred_check_branch
          %809 = sbr.rel (%p807) target = $region60
        $region59: #{tpu_custom_call.1} parent=35 // pred_region
          %811 = dma.done [#allocation6], 64
        $region60: #{tpu_custom_call.1} parent=35 // pred_fallthru
          _
      $region36: #{tpu_custom_call.1} parent=5 // pred_fallthru
        _
      %p812 = scmp.le.s32.totalorder 2, %s17
      // Predicated region
      $region61: #{tpu_custom_call.1} parent=5 // pred_check
        %p813 = pneg %p812
      $region62: #{tpu_custom_call.1} parent=5 // pred_check_branch
        %815 = sbr.rel (%p813) target = $region64
      $region63: #{tpu_custom_call.1} parent=5 // pred_region
        %s816 = ssub.s32 %s17, 2
      $region64: #{tpu_custom_call.1} parent=5 // pred_fallthru
        _
    $region6: #{tpu_custom_call.1} parent=1 // loop_footer
      %s21 = sadd.s32 1, %s17
    $region7: #{tpu_custom_call.1} parent=1 // loop_footer_branch
      %16 = sbr.rel target = $region3
    $region8: #{tpu_custom_call.1} parent=1 // loop_exit
      _
    %817 = vsyncpa [#allocation5], 1
    %s818 = scalar_lea.sflag [#allocation5], 1
    %819 = vsyncpa %s818, 1
    %820 = vsyncpa [#allocation8], 1
    %821 = vsyncpa [#allocation6], 1
    %s822 = scalar_lea.sflag [#allocation6], 1
    %823 = vsyncpa %s822, 1

</llo_original>
